<compile_context>
chip_gen: v5e
topology: v5e:2x2
jax: 0.10.0
libtpu: 0.0.40
codegen_flags: <defaults>
</compile_context>

<pallas_src>
import math

import jax
import jax.numpy as jnp
from jax.experimental import pallas as pl
from jax.experimental.pallas import tpu as pltpu

BN_EPS = 1e-5
LANE = 128
SUBLANE = 8


def _pad_to(n, m):
    return ((n + m - 1) // m) * m


# ----------------------------- Fused kernel ---------------------------------

def _make_fused_kernel(num_residual, e_pad, g_pads, offs, batch, b_pad):
    """Ref order: x, (W_k, packed[b;gamma;beta])_k ..., W_final, b_final,
    out_ref, slab_scratch."""

    def kernel(*refs):
        x_ref = refs[0]
        layer_refs = refs[1:1 + 2 * num_residual]
        w_fin_ref = refs[1 + 2 * num_residual]
        b_fin_ref = refs[2 + 2 * num_residual]
        out_ref = refs[3 + 2 * num_residual]
        slab_ref = refs[4 + 2 * num_residual]

        # Residual stack: computed once (first grid step) into the persistent
        # VMEM activation slab; later grid steps only tile the final Linear.
        @pl.when(pl.program_id(0) == 0)
        def _():
            slab_ref[:, 0:e_pad] = x_ref[...]
            for k in range(num_residual):
                w_ref = layer_refs[2 * k]
                pbg = layer_refs[2 * k + 1][...]            # (3, g_pad) f32
                b, gamma, beta = pbg[0:1, :], pbg[1:2, :], pbg[2:3, :]

                # One large-K MXU dot against the slab prefix (bf16 -> f32).
                h = jnp.dot(slab_ref[:, 0:offs[k]], w_ref[...],
                            preferred_element_type=jnp.float32) + b

                # BatchNorm1d, training mode: batch mean, biased variance.
                if batch == b_pad:
                    mean = jnp.mean(h, axis=0, keepdims=True)
                    hc = h - mean
                    var = jnp.mean(hc * hc, axis=0, keepdims=True)
                else:
                    # Batch was zero-padded to a sublane multiple: mask padded
                    # rows out of the stats, divide by the true batch size.
                    rmask = (jax.lax.broadcasted_iota(
                        jnp.int32, (b_pad, 1), 0) < batch).astype(jnp.float32)
                    inv_b = 1.0 / batch
                    mean = jnp.sum(h * rmask, axis=0, keepdims=True) * inv_b
                    hc = h - mean
                    var = jnp.sum(hc * hc * rmask, axis=0,
                                  keepdims=True) * inv_b

                scale = gamma * jax.lax.rsqrt(var + BN_EPS)  # fold gamma (row op)
                y = jnp.maximum(hc * scale + beta, 0.0)      # ReLU
                slab_ref[:, offs[k]:offs[k] + g_pads[k]] = y.astype(jnp.bfloat16)

        # Final Linear on this output-column tile: one big-K dot on the slab.
        acc = jnp.dot(slab_ref[...], w_fin_ref[...],
                      preferred_element_type=jnp.float32) + b_fin_ref[...]
        out_ref[...] = acc

    return kernel


# ------------------------- Parameter initialization -------------------------

def init_generator_params(key, embedding_dim, generator_dim, data_dim):
    """torch.nn.Linear default init (U(-1/sqrt(fan_in), 1/sqrt(fan_in)));
    BatchNorm gamma=1, beta=0.  Weights stored as (in, out)."""
    params = []
    dim = embedding_dim
    for item in generator_dim:
        key, k_w, k_b = jax.random.split(key, 3)
        bound = 1.0 / math.sqrt(dim)
        w = jax.random.uniform(k_w, (dim, item), jnp.float32, -bound, bound)
        b = jax.random.uniform(k_b, (1, item), jnp.float32, -bound, bound)
        gamma = jnp.ones((1, item), jnp.float32)
        beta = jnp.zeros((1, item), jnp.float32)
        params.append(("residual", w, b, gamma, beta))
        dim += item
    key, k_w, k_b = jax.random.split(key, 3)
    bound = 1.0 / math.sqrt(dim)
    w = jax.random.uniform(k_w, (dim, data_dim), jnp.float32, -bound, bound)
    b = jax.random.uniform(k_b, (1, data_dim), jnp.float32, -bound, bound)
    params.append(("linear", w, b))
    return params


# --------------------------- Input preparation -------------------------------

def _slab_ordered_weight(w, k, gdims, embedding_dim, e_pad, g_pads,
                         out_dim, out_pad):
    """Rearrange a torch-row-ordered weight (rows [y_{k-1},...,y_0,x]) into the
    slab row order [x | y_0 | ... | y_{k-1}], zero-padding every row block and
    the output columns to lane multiples (exact: padded slab columns are zero
    and padded weight rows are zero)."""
    src_off = {}
    off = 0
    for j in reversed(range(k)):
        src_off[j] = off
        off += gdims[j]
    src_x_off = off

    pad_cols = out_pad - out_dim
    pieces = [jnp.pad(w[src_x_off:src_x_off + embedding_dim, :],
                      ((0, e_pad - embedding_dim), (0, pad_cols)))]
    for j in range(k):
        pieces.append(jnp.pad(w[src_off[j]:src_off[j] + gdims[j], :],
                              ((0, g_pads[j] - gdims[j]), (0, pad_cols))))
    return jnp.concatenate(pieces, axis=0).astype(jnp.bfloat16)


def prepare_fused_inputs(params, embedding_dim, generator_dim, data_dim):
    gdims = list(generator_dim)
    num_res = len(gdims)
    e_pad = _pad_to(embedding_dim, LANE)
    g_pads = [_pad_to(g, LANE) for g in gdims]

    offs = []                       # slab column offset of y_k (== layer-k K)
    acc = e_pad
    for gp in g_pads:
        offs.append(acc)
        acc += gp
    w_total = acc
    d_pad = _pad_to(data_dim, LANE)

    flat = []
    for k in range(num_res):
        _, w, b, gamma, beta = params[k]
        g, gp = gdims[k], g_pads[k]
        flat.append(_slab_ordered_weight(w, k, gdims, embedding_dim,
                                         e_pad, g_pads, g, gp))
        # Pack bias / gamma / beta into one (3, gp) f32 input (pads are zero,
        # keeping padded columns exactly zero through BN + ReLU).
        pbg = jnp.concatenate([
            jnp.pad(b, ((0, 0), (0, gp - g))),
            jnp.pad(gamma, ((0, 0), (0, gp - g))),
            jnp.pad(beta, ((0, 0), (0, gp - g)))], axis=0)
        flat.append(pbg)

    _, w, b = params[-1]
    w_fin = _slab_ordered_weight(w, num_res, gdims, embedding_dim, e_pad,
                                 g_pads, data_dim, d_pad)
    b_fin = jnp.pad(b, ((0, 0), (0, d_pad - data_dim)))

    dims = dict(e_pad=e_pad, g_pads=g_pads, offs=offs,
                w_total=w_total, d_pad=d_pad)
    return flat, w_fin, b_fin, dims


# ------------------------------ Forward pass ---------------------------------

def generator_forward(params, x, embedding_dim, generator_dim, data_dim):
    flat, w_fin, b_fin, dims = prepare_fused_inputs(
        params, embedding_dim, generator_dim, data_dim)
    e_pad, g_pads = dims["e_pad"], dims["g_pads"]
    offs, w_total, d_pad = dims["offs"], dims["w_total"], dims["d_pad"]
    num_res = len(generator_dim)

    batch = x.shape[0]
    b_pad = _pad_to(batch, SUBLANE)
    x_p = jnp.pad(x, ((0, b_pad - batch),
                      (0, e_pad - embedding_dim))).astype(jnp.bfloat16)

    # Tile the final layer's output columns so the dominant weight DMA is
    # double-buffered under compute and VMEM use is bounded for big data_dim.
    tn = LANE
    for cand in (512, 256, 128):
        if d_pad % cand == 0:
            tn = cand
            break
    grid = (d_pad // tn,)

    kernel = _make_fused_kernel(num_res, e_pad, g_pads, offs, batch, b_pad)

    in_specs = [pl.BlockSpec(x_p.shape, lambda j: (0, 0))]
    for arr in flat:
        in_specs.append(pl.BlockSpec(arr.shape, lambda j: (0, 0)))
    in_specs.append(pl.BlockSpec((w_total, tn), lambda j: (0, j)))
    in_specs.append(pl.BlockSpec((1, tn), lambda j: (0, j)))
    out_spec = pl.BlockSpec((b_pad, tn), lambda j: (0, j))

    # Explicit VMEM budget: resident inputs + slab + double-buffered N tiles.
    resident = (x_p.size * x_p.dtype.itemsize
                + sum(a.size * a.dtype.itemsize for a in flat)
                + b_pad * w_total * 2)                       # bf16 slab scratch
    pipelined = 2 * (w_total * tn * 2 + tn * 4 + b_pad * tn * 4)
    vmem_limit = max(32 << 20, min(resident + pipelined + (8 << 20), 100 << 20))

    out = pl.pallas_call(
        kernel,
        out_shape=jax.ShapeDtypeStruct((b_pad, d_pad), jnp.float32),
        grid_spec=pltpu.PrefetchScalarGridSpec(
            num_scalar_prefetch=0,
            grid=grid,
            in_specs=in_specs,
            out_specs=out_spec,
            scratch_shapes=[pltpu.VMEM((b_pad, w_total), jnp.bfloat16)]),
        compiler_params=pltpu.CompilerParams(
            # "arbitrary": the scratch slab written at step 0 must stay visible
            # to every later step, so the grid must run on one TensorCore.
            dimension_semantics=("arbitrary",),
            vmem_limit_bytes=int(vmem_limit)),
    )(x_p, *flat, w_fin, b_fin)

    # TODO(synk): CTGAN's downstream _apply_activate could consume the padded
    # (b_pad, d_pad) output directly instead of paying this extra slice.
    return out[:batch, :data_dim]


def generator_forward_ref(params, x):
    """Pure-JAX reference with matching numerics (bf16 MXU operands, f32
    accumulation and BatchNorm math), unpadded weights, explicit concat."""
    h = x.astype(jnp.bfloat16)
    out = None
    for p in params:
        if p[0] == "residual":
            _, w, b, gamma, beta = p
            y = jnp.dot(h, w.astype(jnp.bfloat16),
                        preferred_element_type=jnp.float32) + b
            mean = jnp.mean(y, axis=0, keepdims=True)
            yc = y - mean
            var = jnp.mean(yc * yc, axis=0, keepdims=True)
            y = jnp.maximum(yc * (gamma * jax.lax.rsqrt(var + BN_EPS)) + beta,
                            0.0)
            h = jnp.concatenate([y.astype(jnp.bfloat16), h], axis=1)
        else:
            _, w, b = p
            out = jnp.dot(h, w.astype(jnp.bfloat16),
                          preferred_element_type=jnp.float32) + b
    return out


# --------------------------------- Main --------------------------------------

if __name__ == "__main__":
    embedding_dim = 32
    generator_dim = (32, 32)
    data_dim = 16
    batch = 8

    key = jax.random.PRNGKey(0)
    key_params, key_x = jax.random.split(key)

    params = init_generator_params(key_params, embedding_dim, generator_dim,
                                   data_dim)
    x = jax.random.normal(key_x, (batch, embedding_dim), dtype=jnp.float32)

    out = generator_forward(params, x, embedding_dim, generator_dim, data_dim)
    out = jax.block_until_ready(out)
    assert out.shape == (batch, data_dim), out.shape

    ref = jax.block_until_ready(generator_forward_ref(params, x))
    max_diff = float(jnp.max(jnp.abs(out - ref)))
    assert jnp.allclose(out, ref, rtol=2e-3, atol=2e-3), (
        f"mismatch vs. JAX reference: max abs diff = {max_diff}")

    print("KERNEL_OK")
</pallas_src>

<mosaic_0001>
module attributes {stable_mosaic.version = 11 : i64} {
  func.func @kernel(%arg0: i32, %arg1: memref<8x128xbf16, #tpu.memory_space<vmem>>, %arg2: memref<128x128xbf16, #tpu.memory_space<vmem>>, %arg3: memref<3x128xf32, #tpu.memory_space<vmem>>, %arg4: memref<256x128xbf16, #tpu.memory_space<vmem>>, %arg5: memref<3x128xf32, #tpu.memory_space<vmem>>, %arg6: memref<384x128xbf16, #tpu.memory_space<vmem>>, %arg7: memref<1x128xf32, #tpu.memory_space<vmem>>, %arg8: memref<8x128xf32, #tpu.memory_space<vmem>>, %arg9: memref<8x384xbf16, #tpu.memory_space<vmem>>) attributes {dimension_semantics = [#tpu.dimension_semantics<arbitrary>], iteration_bounds = array<i64: 1>, scalar_prefetch = 0 : i64, scratch_operands = 1 : i64, tpu.core_type = #tpu.core_type<tc>, window_params = [{pipeline_mode = #tpu.pipeline_mode<synchronous>, transform_indices = @transform_0, window_bounds = array<i64: 8, 128>}, {pipeline_mode = #tpu.pipeline_mode<synchronous>, transform_indices = @transform_1, window_bounds = array<i64: 128, 128>}, {pipeline_mode = #tpu.pipeline_mode<synchronous>, transform_indices = @transform_2, window_bounds = array<i64: 3, 128>}, {pipeline_mode = #tpu.pipeline_mode<synchronous>, transform_indices = @transform_3, window_bounds = array<i64: 256, 128>}, {pipeline_mode = #tpu.pipeline_mode<synchronous>, transform_indices = @transform_4, window_bounds = array<i64: 3, 128>}, {transform_indices = @transform_5, window_bounds = array<i64: 384, 128>}, {transform_indices = @transform_6, window_bounds = array<i64: 1, 128>}, {transform_indices = @transform_7, window_bounds = array<i64: 8, 128>}]} {
    %c0_i32 = arith.constant 0 : i32
    %0 = arith.cmpi eq, %arg0, %c0_i32 : i32
    %1 = arith.extui %0 : i1 to i32
    %c0_i32_0 = arith.constant 0 : i32
    %2 = arith.cmpi ne, %1, %c0_i32_0 : i32
    scf.if %2 {
      %c0_8 = arith.constant 0 : index
      %c0_9 = arith.constant 0 : index
      %10 = vector.load %arg1[%c0_8, %c0_9] : memref<8x128xbf16, #tpu.memory_space<vmem>>, vector<8x128xbf16>
      %c0_10 = arith.constant 0 : index
      %c0_11 = arith.constant 0 : index
      %11 = vector.load %arg9[%c0_10, %c0_11] : memref<8x384xbf16, #tpu.memory_space<vmem>>, vector<8x128xbf16>
      tpu.vector_store %arg9[%c0_10, %c0_11], %10 {strides = array<i32>} : memref<8x384xbf16, #tpu.memory_space<vmem>>, vector<8x128xbf16>,
      %c0_12 = arith.constant 0 : index
      %c0_13 = arith.constant 0 : index
      %12 = vector.load %arg3[%c0_12, %c0_13] : memref<3x128xf32, #tpu.memory_space<vmem>>, vector<3x128xf32>
      %13 = vector.extract_strided_slice %12 {offsets = [0, 0], sizes = [1, 128], strides = [1, 1]} : vector<3x128xf32> to vector<1x128xf32>
      %14 = vector.extract_strided_slice %12 {offsets = [1, 0], sizes = [1, 128], strides = [1, 1]} : vector<3x128xf32> to vector<1x128xf32>
      %15 = vector.extract_strided_slice %12 {offsets = [2, 0], sizes = [1, 128], strides = [1, 1]} : vector<3x128xf32> to vector<1x128xf32>
      %c0_14 = arith.constant 0 : index
      %c0_15 = arith.constant 0 : index
      %16 = vector.load %arg9[%c0_14, %c0_15] : memref<8x384xbf16, #tpu.memory_space<vmem>>, vector<8x128xbf16>
      %c0_16 = arith.constant 0 : index
      %c0_17 = arith.constant 0 : index
      %17 = vector.load %arg2[%c0_16, %c0_17] : memref<128x128xbf16, #tpu.memory_space<vmem>>, vector<128x128xbf16>
      %cst_18 = arith.constant dense<0.000000e+00> : vector<8x128xf32>
      %18 = tpu.matmul %16, %17, %cst_18 {dimension_numbers = #tpu.dot_dimension_numbers<[1], [0], [0], [1], [0, 0, 1, 1], [], []>} : vector<8x128xbf16>, vector<128x128xbf16>, vector<8x128xf32> -> vector<8x128xf32>
      %19 = vector.broadcast %13 : vector<1x128xf32> to vector<8x128xf32>
      %20 = arith.addf %18, %19 : vector<8x128xf32>
      %cst_19 = arith.constant dense<0.000000e+00> : vector<128xf32>
      %21 = vector.multi_reduction <add>, %20, %cst_19 [0] : vector<8x128xf32> to vector<128xf32>
      %22 = vector.shape_cast %21 : vector<128xf32> to vector<1x128xf32>
      %cst_20 = arith.constant 8.000000e+00 : f32
      %23 = vector.broadcast %cst_20 : f32 to vector<1x128xf32>
      %24 = arith.divf %22, %23 : vector<1x128xf32>
      %25 = vector.broadcast %24 : vector<1x128xf32> to vector<8x128xf32>
      %26 = arith.subf %20, %25 : vector<8x128xf32>
      %27 = arith.mulf %26, %26 : vector<8x128xf32>
      %cst_21 = arith.constant dense<0.000000e+00> : vector<128xf32>
      %28 = vector.multi_reduction <add>, %27, %cst_21 [0] : vector<8x128xf32> to vector<128xf32>
      %29 = vector.shape_cast %28 : vector<128xf32> to vector<1x128xf32>
      %cst_22 = arith.constant 8.000000e+00 : f32
      %30 = vector.broadcast %cst_22 : f32 to vector<1x128xf32>
      %31 = arith.divf %29, %30 : vector<1x128xf32>
      %cst_23 = arith.constant 9.99999974E-6 : f32
      %32 = vector.broadcast %cst_23 : f32 to vector<1x128xf32>
      %33 = arith.addf %31, %32 : vector<1x128xf32>
      %34 = math.rsqrt %33 : vector<1x128xf32>
      %35 = arith.mulf %14, %34 : vector<1x128xf32>
      %36 = vector.broadcast %35 : vector<1x128xf32> to vector<8x128xf32>
      %37 = arith.mulf %26, %36 : vector<8x128xf32>
      %38 = vector.broadcast %15 : vector<1x128xf32> to vector<8x128xf32>
      %39 = arith.addf %37, %38 : vector<8x128xf32>
      %cst_24 = arith.constant 0.000000e+00 : f32
      %40 = vector.broadcast %cst_24 : f32 to vector<8x128xf32>
      %41 = arith.maximumf %39, %40 : vector<8x128xf32>
      %42 = arith.truncf %41 : vector<8x128xf32> to vector<8x128xbf16>
      %c0_25 = arith.constant 0 : index
      %c128 = arith.constant 128 : index
      %43 = vector.load %arg9[%c0_25, %c128] : memref<8x384xbf16, #tpu.memory_space<vmem>>, vector<8x128xbf16>
      tpu.vector_store %arg9[%c0_25, %c128], %42 {strides = array<i32>} : memref<8x384xbf16, #tpu.memory_space<vmem>>, vector<8x128xbf16>,
      %c0_26 = arith.constant 0 : index
      %c0_27 = arith.constant 0 : index
      %44 = vector.load %arg5[%c0_26, %c0_27] : memref<3x128xf32, #tpu.memory_space<vmem>>, vector<3x128xf32>
      %45 = vector.extract_strided_slice %44 {offsets = [0, 0], sizes = [1, 128], strides = [1, 1]} : vector<3x128xf32> to vector<1x128xf32>
      %46 = vector.extract_strided_slice %44 {offsets = [1, 0], sizes = [1, 128], strides = [1, 1]} : vector<3x128xf32> to vector<1x128xf32>
      %47 = vector.extract_strided_slice %44 {offsets = [2, 0], sizes = [1, 128], strides = [1, 1]} : vector<3x128xf32> to vector<1x128xf32>
      %c0_28 = arith.constant 0 : index
      %c0_29 = arith.constant 0 : index
      %48 = vector.load %arg9[%c0_28, %c0_29] : memref<8x384xbf16, #tpu.memory_space<vmem>>, vector<8x256xbf16>
      %c0_30 = arith.constant 0 : index
      %c0_31 = arith.constant 0 : index
      %49 = vector.load %arg4[%c0_30, %c0_31] : memref<256x128xbf16, #tpu.memory_space<vmem>>, vector<256x128xbf16>
      %cst_32 = arith.constant dense<0.000000e+00> : vector<8x128xf32>
      %50 = tpu.matmul %48, %49, %cst_32 {dimension_numbers = #tpu.dot_dimension_numbers<[1], [0], [0], [1], [0, 0, 1, 1], [], []>} : vector<8x256xbf16>, vector<256x128xbf16>, vector<8x128xf32> -> vector<8x128xf32>
      %51 = vector.broadcast %45 : vector<1x128xf32> to vector<8x128xf32>
      %52 = arith.addf %50, %51 : vector<8x128xf32>
      %cst_33 = arith.constant dense<0.000000e+00> : vector<128xf32>
      %53 = vector.multi_reduction <add>, %52, %cst_33 [0] : vector<8x128xf32> to vector<128xf32>
      %54 = vector.shape_cast %53 : vector<128xf32> to vector<1x128xf32>
      %cst_34 = arith.constant 8.000000e+00 : f32
      %55 = vector.broadcast %cst_34 : f32 to vector<1x128xf32>
      %56 = arith.divf %54, %55 : vector<1x128xf32>
      %57 = vector.broadcast %56 : vector<1x128xf32> to vector<8x128xf32>
      %58 = arith.subf %52, %57 : vector<8x128xf32>
      %59 = arith.mulf %58, %58 : vector<8x128xf32>
      %cst_35 = arith.constant dense<0.000000e+00> : vector<128xf32>
      %60 = vector.multi_reduction <add>, %59, %cst_35 [0] : vector<8x128xf32> to vector<128xf32>
      %61 = vector.shape_cast %60 : vector<128xf32> to vector<1x128xf32>
      %cst_36 = arith.constant 8.000000e+00 : f32
      %62 = vector.broadcast %cst_36 : f32 to vector<1x128xf32>
      %63 = arith.divf %61, %62 : vector<1x128xf32>
      %cst_37 = arith.constant 9.99999974E-6 : f32
      %64 = vector.broadcast %cst_37 : f32 to vector<1x128xf32>
      %65 = arith.addf %63, %64 : vector<1x128xf32>
      %66 = math.rsqrt %65 : vector<1x128xf32>
      %67 = arith.mulf %46, %66 : vector<1x128xf32>
      %68 = vector.broadcast %67 : vector<1x128xf32> to vector<8x128xf32>
      %69 = arith.mulf %58, %68 : vector<8x128xf32>
      %70 = vector.broadcast %47 : vector<1x128xf32> to vector<8x128xf32>
      %71 = arith.addf %69, %70 : vector<8x128xf32>
      %cst_38 = arith.constant 0.000000e+00 : f32
      %72 = vector.broadcast %cst_38 : f32 to vector<8x128xf32>
      %73 = arith.maximumf %71, %72 : vector<8x128xf32>
      %74 = arith.truncf %73 : vector<8x128xf32> to vector<8x128xbf16>
      %c0_39 = arith.constant 0 : index
      %c256 = arith.constant 256 : index
      %75 = vector.load %arg9[%c0_39, %c256] : memref<8x384xbf16, #tpu.memory_space<vmem>>, vector<8x128xbf16>
      tpu.vector_store %arg9[%c0_39, %c256], %74 {strides = array<i32>} : memref<8x384xbf16, #tpu.memory_space<vmem>>, vector<8x128xbf16>,
    } else {
    }
    %c0 = arith.constant 0 : index
    %c0_1 = arith.constant 0 : index
    %3 = vector.load %arg9[%c0, %c0_1] : memref<8x384xbf16, #tpu.memory_space<vmem>>, vector<8x384xbf16>
    %c0_2 = arith.constant 0 : index
    %c0_3 = arith.constant 0 : index
    %4 = vector.load %arg6[%c0_2, %c0_3] : memref<384x128xbf16, #tpu.memory_space<vmem>>, vector<384x128xbf16>
    %cst = arith.constant dense<0.000000e+00> : vector<8x128xf32>
    %5 = tpu.matmul %3, %4, %cst {dimension_numbers = #tpu.dot_dimension_numbers<[1], [0], [0], [1], [0, 0, 1, 1], [], []>} : vector<8x384xbf16>, vector<384x128xbf16>, vector<8x128xf32> -> vector<8x128xf32>
    %c0_4 = arith.constant 0 : index
    %c0_5 = arith.constant 0 : index
    %6 = vector.load %arg7[%c0_4, %c0_5] : memref<1x128xf32, #tpu.memory_space<vmem>>, vector<1x128xf32>
    %7 = vector.broadcast %6 : vector<1x128xf32> to vector<8x128xf32>
    %8 = arith.addf %5, %7 : vector<8x128xf32>
    %c0_6 = arith.constant 0 : index
    %c0_7 = arith.constant 0 : index
    %9 = vector.load %arg8[%c0_6, %c0_7] : memref<8x128xf32, #tpu.memory_space<vmem>>, vector<8x128xf32>
    tpu.vector_store %arg8[%c0_6, %c0_7], %8 {strides = array<i32>} : memref<8x128xf32, #tpu.memory_space<vmem>>, vector<8x128xf32>,
    return
  }
  func.func @transform_0(%arg0: i32) -> (i32, i32) {
    %c0_i32 = arith.constant 0 : i32
    %c0_i32_0 = arith.constant 0 : i32
    %c0_i32_1 = arith.constant 0 : i32
    return %c0_i32, %c0_i32_0 : i32, i32
  }
  func.func @transform_1(%arg0: i32) -> (i32, i32) {
    %c0_i32 = arith.constant 0 : i32
    %c0_i32_0 = arith.constant 0 : i32
    %c0_i32_1 = arith.constant 0 : i32
    return %c0_i32, %c0_i32_0 : i32, i32
  }
  func.func @transform_2(%arg0: i32) -> (i32, i32) {
    %c0_i32 = arith.constant 0 : i32
    %c0_i32_0 = arith.constant 0 : i32
    %c0_i32_1 = arith.constant 0 : i32
    return %c0_i32, %c0_i32_0 : i32, i32
  }
  func.func @transform_3(%arg0: i32) -> (i32, i32) {
    %c0_i32 = arith.constant 0 : i32
    %c0_i32_0 = arith.constant 0 : i32
    %c0_i32_1 = arith.constant 0 : i32
    return %c0_i32, %c0_i32_0 : i32, i32
  }
  func.func @transform_4(%arg0: i32) -> (i32, i32) {
    %c0_i32 = arith.constant 0 : i32
    %c0_i32_0 = arith.constant 0 : i32
    %c0_i32_1 = arith.constant 0 : i32
    return %c0_i32, %c0_i32_0 : i32, i32
  }
  func.func @transform_5(%arg0: i32) -> (i32, i32) {
    %c0_i32 = arith.constant 0 : i32
    %c0_i32_0 = arith.constant 0 : i32
    return %c0_i32, %arg0 : i32, i32
  }
  func.func @transform_6(%arg0: i32) -> (i32, i32) {
    %c0_i32 = arith.constant 0 : i32
    %c0_i32_0 = arith.constant 0 : i32
    return %c0_i32, %arg0 : i32, i32
  }
  func.func @transform_7(%arg0: i32) -> (i32, i32) {
    %c0_i32 = arith.constant 0 : i32
    %c0_i32_0 = arith.constant 0 : i32
    return %c0_i32, %arg0 : i32, i32
  }
}

</mosaic_0001>

<llo_original>
// kernel: tpu_custom_call.1
$region0: #{tpu_custom_call.1}
  #allocation0 [shape = 'u32[]', space=smem, size = 0x4, offset = 0x4, fixed_abs, tag = 'smem constant byte address 0x4 - core index']
  #allocation1 [shape = 'u32[72,128]{1,0:T(1,128)}', space=vmem, size = 0x9000, scoped, tag = 'internal scratch']
  #allocation2 [shape = 'bf16[8,384]{1,0:T(8,128)(2,1)}', space=vmem, size = 0x1800, scoped, tag = 'scratch operand']
  %s0 = inlined_call_operand.hbm [shape: bf16[8,128], index: 0, kind: input, shape index: {}]
  %s1 = inlined_call_operand.hbm [shape: bf16[128,128], index: 1, kind: input, shape index: {}]
  %s2 = inlined_call_operand.hbm [shape: f32[3,128], index: 2, kind: input, shape index: {}]
  %s3 = inlined_call_operand.hbm [shape: bf16[256,128], index: 3, kind: input, shape index: {}]
  %s4 = inlined_call_operand.hbm [shape: f32[3,128], index: 4, kind: input, shape index: {}]
  %s5 = inlined_call_operand.hbm [shape: bf16[384,128], index: 5, kind: input, shape index: {}]
  %s6 = inlined_call_operand.vmem [shape: f32[1,128], index: 6, kind: input, shape index: {}]
  %s7 = inlined_call_operand.hbm [shape: f32[8,128], index: 7, kind: output, shape index: {}]
  %s8 = sld [smem:[#allocation0]]
  $region66: #{tpu_custom_call.1} parent=0
    _
  %s10 = ssub.s32 1, %s8
  %s11 = scalar_select 0, %s10, %s8
  $region1: #{tpu_custom_call.1} parent=0
    #allocation3 [shape = 'u8[2048]{0}', space=vmem, size = 0x800, scoped, tag = 'input window, operand 0, single buffered']
    #allocation4 [shape = 's32[1]{0}', space=sflag, size = 0x4, scoped, tag = 'scoped memory for tpu_custom_call.1']
    #allocation5 [shape = 's32[1]{0}', space=sflag, size = 0x4, scoped, tag = 'scoped memory for tpu_custom_call.1']
    #allocation6 [shape = 'u8[32768]{0}', space=vmem, size = 0x8000, scoped, tag = 'input window, operand 1, single buffered']
    #allocation7 [shape = 's32[1]{0}', space=sflag, size = 0x4, scoped, tag = 'scoped memory for tpu_custom_call.1']
    #allocation8 [shape = 'u8[2048]{0}', space=vmem, size = 0x800, scoped, tag = 'input window, operand 2, single buffered']
    #allocation9 [shape = 'u8[65536]{0}', space=vmem, size = 0x10000, scoped, tag = 'input window, operand 3, single buffered']
    #allocation10 [shape = 's32[1]{0}', space=sflag, size = 0x4, scoped, tag = 'scoped memory for tpu_custom_call.1']
    #allocation11 [shape = 'u8[2048]{0}', space=vmem, size = 0x800, scoped, tag = 'input window, operand 4, single buffered']
    #allocation12 [shape = 'u8[98304]{0}', space=vmem, size = 0x18000, scoped, tag = 'input window, operand 5, single buffered']
    #allocation13 [shape = 's32[1]{0}', space=sflag, size = 0x4, scoped, tag = 'scoped memory for tpu_custom_call.1']
    #allocation14 [shape = 'u8[4096]{0}', space=vmem, size = 0x1000, scoped, tag = 'output window, operand 0, single buffered']
    %12 = vsyncpa [#allocation4], 0
    %13 = vsyncpa [#allocation7], 0
    %14 = vsyncpa [#allocation10], 0
    %15 = vsyncpa [#allocation13], 0
    %16 = vsyncpa [#allocation5], 0
    // Predicated region
    $region2: #{tpu_custom_call.1} parent=1 // pred_check
      _
    $region3: #{tpu_custom_call.1} parent=1 // pred_check_branch
      %18 = sbr.rel (0) target = $region5
    $region4: #{tpu_custom_call.1} parent=1 // pred_region
      %20 = vsyncadd [#allocation4], 0
      %s22 = sshll.u32 %s0, 4
      %s23 = int_to_ptr.hbm [resolvable:$true] %s22
      %s24 = sshll.u32 [#allocation3], 4
      %s25 = int_to_ptr.vmem [resolvable:$true] %s24
      %27 = dma.hbm_to_vmem [thread:$0]  %s23, 64, %s25, [#allocation4]
    $region5: #{tpu_custom_call.1} parent=1 // pred_fallthru
      _
    // Predicated region
    $region6: #{tpu_custom_call.1} parent=1 // pred_check
      _
    $region7: #{tpu_custom_call.1} parent=1 // pred_check_branch
      %29 = sbr.rel (0) target = $region9
    $region8: #{tpu_custom_call.1} parent=1 // pred_region
      %31 = vsyncadd [#allocation7], 0
      %s32 = sshll.u32 %s1, 4
      %s33 = int_to_ptr.hbm [resolvable:$true] %s32
      %s34 = sshll.u32 [#allocation6], 4
      %s35 = int_to_ptr.vmem [resolvable:$true] %s34
      %40 = dma.hbm_to_vmem [thread:$0]  %s33, 1024, %s35, [#allocation7], 64, 64, 4
    $region9: #{tpu_custom_call.1} parent=1 // pred_fallthru
      _
    // Predicated region
    $region10: #{tpu_custom_call.1} parent=1 // pred_check
      _
    $region11: #{tpu_custom_call.1} parent=1 // pred_check_branch
      %42 = sbr.rel (0) target = $region13
    $region12: #{tpu_custom_call.1} parent=1 // pred_region
      %44 = vsyncadd [#allocation7], 0
      %s46 = sshll.u32 %s2, 4
      %s47 = int_to_ptr.hbm [resolvable:$true] %s46
      %s48 = sshll.u32 [#allocation8], 4
      %s49 = int_to_ptr.vmem [resolvable:$true] %s48
      %51 = dma.hbm_to_vmem [thread:$0]  %s47, 64, %s49, [#allocation7]
    $region13: #{tpu_custom_call.1} parent=1 // pred_fallthru
      _
    // Predicated region
    $region14: #{tpu_custom_call.1} parent=1 // pred_check
      _
    $region15: #{tpu_custom_call.1} parent=1 // pred_check_branch
      %53 = sbr.rel (0) target = $region17
    $region16: #{tpu_custom_call.1} parent=1 // pred_region
      %55 = vsyncadd [#allocation10], 0
      %s56 = sshll.u32 %s3, 4
      %s57 = int_to_ptr.hbm [resolvable:$true] %s56
      %s58 = sshll.u32 [#allocation9], 4
      %s59 = int_to_ptr.vmem [resolvable:$true] %s58
      %64 = dma.hbm_to_vmem [thread:$0]  %s57, 2048, %s59, [#allocation10], 64, 64, 4
    $region17: #{tpu_custom_call.1} parent=1 // pred_fallthru
      _
    // Predicated region
    $region18: #{tpu_custom_call.1} parent=1 // pred_check
      _
    $region19: #{tpu_custom_call.1} parent=1 // pred_check_branch
      %66 = sbr.rel (0) target = $region21
    $region20: #{tpu_custom_call.1} parent=1 // pred_region
      %68 = vsyncadd [#allocation10], 0
      %s70 = sshll.u32 %s4, 4
      %s71 = int_to_ptr.hbm [resolvable:$true] %s70
      %s72 = sshll.u32 [#allocation11], 4
      %s73 = int_to_ptr.vmem [resolvable:$true] %s72
      %75 = dma.hbm_to_vmem [thread:$0]  %s71, 64, %s73, [#allocation10]
    $region21: #{tpu_custom_call.1} parent=1 // pred_fallthru
      _
    // Predicated region
    $region22: #{tpu_custom_call.1} parent=1 // pred_check
      _
    $region23: #{tpu_custom_call.1} parent=1 // pred_check_branch
      %77 = sbr.rel (0) target = $region25
    $region24: #{tpu_custom_call.1} parent=1 // pred_region
      %79 = vsyncadd [#allocation13], 0
      %s80 = sshll.u32 %s5, 4
      %s81 = int_to_ptr.hbm [resolvable:$true] %s80
      %s82 = sshll.u32 [#allocation12], 4
      %s83 = int_to_ptr.vmem [resolvable:$true] %s82
      %88 = dma.hbm_to_vmem [thread:$0]  %s81, 3072, %s83, [#allocation13], 64, 64, 4
    $region25: #{tpu_custom_call.1} parent=1 // pred_fallthru
      _
    // Predicated region
    $region26: #{tpu_custom_call.1} parent=1 // pred_check
      _
    $region27: #{tpu_custom_call.1} parent=1 // pred_check_branch
      %90 = sbr.rel (0) target = $region29
    $region28: #{tpu_custom_call.1} parent=1 // pred_region
      _
    $region29: #{tpu_custom_call.1} parent=1 // pred_fallthru
      _
    // Predicated region
    $region30: #{tpu_custom_call.1} parent=1 // pred_check
      _
    $region31: #{tpu_custom_call.1} parent=1 // pred_check_branch
      %92 = sbr.rel (0) target = $region33
    $region32: #{tpu_custom_call.1} parent=1 // pred_region
      %94 = dma.done [#allocation4], 64
    $region33: #{tpu_custom_call.1} parent=1 // pred_fallthru
      _
    // Predicated region
    $region34: #{tpu_custom_call.1} parent=1 // pred_check
      _
    $region35: #{tpu_custom_call.1} parent=1 // pred_check_branch
      %96 = sbr.rel (0) target = $region37
    $region36: #{tpu_custom_call.1} parent=1 // pred_region
      %98 = dma.done [#allocation7], 1024
    $region37: #{tpu_custom_call.1} parent=1 // pred_fallthru
      _
    // Predicated region
    $region38: #{tpu_custom_call.1} parent=1 // pred_check
      _
    $region39: #{tpu_custom_call.1} parent=1 // pred_check_branch
      %100 = sbr.rel (0) target = $region41
    $region40: #{tpu_custom_call.1} parent=1 // pred_region
      %102 = dma.done [#allocation7], 64
    $region41: #{tpu_custom_call.1} parent=1 // pred_fallthru
      _
    // Predicated region
    $region42: #{tpu_custom_call.1} parent=1 // pred_check
      _
    $region43: #{tpu_custom_call.1} parent=1 // pred_check_branch
      %104 = sbr.rel (0) target = $region45
    $region44: #{tpu_custom_call.1} parent=1 // pred_region
      %106 = dma.done [#allocation10], 2048
    $region45: #{tpu_custom_call.1} parent=1 // pred_fallthru
      _
    // Predicated region
    $region46: #{tpu_custom_call.1} parent=1 // pred_check
      _
    $region47: #{tpu_custom_call.1} parent=1 // pred_check_branch
      %108 = sbr.rel (0) target = $region49
    $region48: #{tpu_custom_call.1} parent=1 // pred_region
      %110 = dma.done [#allocation10], 64
    $region49: #{tpu_custom_call.1} parent=1 // pred_fallthru
      _
    // Predicated region
    $region50: #{tpu_custom_call.1} parent=1 // pred_check
      _
    $region51: #{tpu_custom_call.1} parent=1 // pred_check_branch
      %112 = sbr.rel (0) target = $region53
    $region52: #{tpu_custom_call.1} parent=1 // pred_region
      %114 = dma.done [#allocation13], 3072
    $region53: #{tpu_custom_call.1} parent=1 // pred_fallthru
      _
    %p115 = scmp.eq.s32.totalorder 0, 0
    // Predicated region
    $region54: #{tpu_custom_call.1} parent=1 // pred_check
      %p116 = pneg %p115
    $region55: #{tpu_custom_call.1} parent=1 // pred_check_branch
      %118 = sbr.rel (%p116) target = $region57
    $region56: #{tpu_custom_call.1} parent=1 // pred_region
      %v119 = vld [vmem:[#allocation3] sm:$0xf]
      %120 = vst [vmem:[#allocation2] sm:$0xf] %v119
      %v121 = vld [vmem:[#allocation8] sm:$0x7]
      %v122 = vld [vmem:[#allocation2] sm:$0xf]
      %v123 = vld [vmem:[#allocation6] sm:$0xf]
      %v124 = vld [vmem:[#allocation6 + $0x4] sm:$0xf]
      %v125 = vld [vmem:[#allocation6 + $0x8] sm:$0xf]
      %v126 = vld [vmem:[#allocation6 + $0xc] sm:$0xf]
      %v127 = vld [vmem:[#allocation6 + $0x10] sm:$0xf]
      %v128 = vld [vmem:[#allocation6 + $0x14] sm:$0xf]
      %v129 = vld [vmem:[#allocation6 + $0x18] sm:$0xf]
      %v130 = vld [vmem:[#allocation6 + $0x1c] sm:$0xf]
      %v131 = vld [vmem:[#allocation6 + $0x20] sm:$0xf]
      %v132 = vld [vmem:[#allocation6 + $0x24] sm:$0xf]
      %v133 = vld [vmem:[#allocation6 + $0x28] sm:$0xf]
      %v134 = vld [vmem:[#allocation6 + $0x2c] sm:$0xf]
      %v135 = vld [vmem:[#allocation6 + $0x30] sm:$0xf]
      %v136 = vld [vmem:[#allocation6 + $0x34] sm:$0xf]
      %v137 = vld [vmem:[#allocation6 + $0x38] sm:$0xf]
      %v138 = vld [vmem:[#allocation6 + $0x3c] sm:$0xf]
      %v139 = vperm.slane %v121, 0
      %v156 = vunpack.c.l.b16 %v123
      %v157 = vunpack.c.l.b16 %v124
      %v158 = vunpack.c.l.b16 %v125
      %v159 = vunpack.c.l.b16 %v126
      %v160 = vunpack.c.l.b16 %v127
      %v161 = vunpack.c.l.b16 %v128
      %v162 = vunpack.c.l.b16 %v129
      %v163 = vunpack.c.l.b16 %v130
      %v164 = vunpack.c.l.b16 %v131
      %v165 = vunpack.c.l.b16 %v132
      %v166 = vunpack.c.l.b16 %v133
      %v167 = vunpack.c.l.b16 %v134
      %v168 = vunpack.c.l.b16 %v135
      %v169 = vunpack.c.l.b16 %v136
      %v170 = vunpack.c.l.b16 %v137
      %v171 = vunpack.c.l.b16 %v138
      %v172 = vpack.c.b16 %v157, %v156
      %v173 = vpack.c.b16 %v159, %v158
      %v174 = vpack.c.b16 %v161, %v160
      %v175 = vpack.c.b16 %v163, %v162
      %v176 = vpack.c.b16 %v165, %v164
      %v177 = vpack.c.b16 %v167, %v166
      %v178 = vpack.c.b16 %v169, %v168
      %v179 = vpack.c.b16 %v171, %v170
      %188 = vmatpush.bf16.msra.mxu0 %v179
      %189 = vmatpush.bf16.msra.mxu0 %v178
      %190 = vmatpush.bf16.msra.mxu0 %v177
      %191 = vmatpush.bf16.msra.mxu0 %v176
      %192 = vmatpush.bf16.msra.mxu0 %v175
      %193 = vmatpush.bf16.msra.mxu0 %v174
      %194 = vmatpush.bf16.msra.mxu0 %v173
      %195 = vmatpush.bf16.msra.mxu0 %v172
      %196 = vmatmul.bf16.gmra.mxu0 %v122
      %v197 = vpop.f32.mrf.mxu0
      %v198 = vadd.f32 %v139, %v197
      %v199 = vpop.f32.mrf.mxu0
      %200 = vdwg.mxu0
      %v201 = vrot.slane %v198, 4
      %v202 = vadd.f32 %v198, %v201
      %v203 = vrot.slane %v202, 2
      %v204 = vadd.f32 %v202, %v203
      %v205 = vrot.slane %v204, 1
      %v206 = vadd.f32 %v204, %v205
      %v207 = vrcp.pop 8.0
      %v208 = vmul.f32 8.0, %v207
      %v209 = vsub.f32 1.0, %v208
      %v210 = vmul.f32 %v207, %v209
      %v211 = vadd.f32 %v207, %v210
      %vm212 = vweird.f32 %v207
      %v213 = vsel %vm212, %v207, %v211
      %v214 = vmul.f32 %v206, %v213
      %v215 = vsub.f32 %v198, %v214
      %v216 = vmul.f32 %v215, %v215
      %v217 = vrot.slane %v216, 4
      %v218 = vadd.f32 %v216, %v217
      %v219 = vrot.slane %v218, 2
      %v220 = vadd.f32 %v218, %v219
      %v221 = vrot.slane %v220, 1
      %v222 = vadd.f32 %v220, %v221
      %v223 = vmul.f32 %v222, %v213
      %v224 = vadd.f32 %v223, 1e-05
      %v225 = vrsqrt.pop %v224
      %v226 = vmul.f32 %v225, %v224
      %v227 = vmul.f32 %v226, %v225
      %v228 = vmul.f32 0.5, %v227
      %v229 = vsub.f32 1.5, %v228
      %v230 = vmul.f32 %v225, %v229
      %vm231 = vweird.f32 %v224
      %vm232 = vweird.f32 %v225
      %vm233 = vmor %vm231, %vm232
      %v234 = vsel %vm233, %v225, %v230
      %v235 = vmul.f32 %v121, %v234
      %v236 = vperm.slane %v235, 1
      %v237 = vmul.f32 %v215, %v236
      %v238 = vperm.slane %v121, 2
      %v239 = vadd.f32 %v237, %v238
      %v240 = vmax.f32 %v239, 0.0
      %v241 = vpack.c.bf16 %v240, %v240
      %242 = vst [vmem:[#allocation2 + $0x4] sm:$0xf] %v241
      %v243 = vld [vmem:[#allocation11] sm:$0x7]
      %v244 = vld [vmem:[#allocation2] sm:$0xff]
      %v245 = vld [vmem:[#allocation9] sm:$0xf]
      %v246 = vld [vmem:[#allocation9 + $0x4] sm:$0xf]
      %v247 = vld [vmem:[#allocation9 + $0x8] sm:$0xf]
      %v248 = vld [vmem:[#allocation9 + $0xc] sm:$0xf]
      %v249 = vld [vmem:[#allocation9 + $0x10] sm:$0xf]
      %v250 = vld [vmem:[#allocation9 + $0x14] sm:$0xf]
      %v251 = vld [vmem:[#allocation9 + $0x18] sm:$0xf]
      %v252 = vld [vmem:[#allocation9 + $0x1c] sm:$0xf]
      %v253 = vld [vmem:[#allocation9 + $0x20] sm:$0xf]
      %v254 = vld [vmem:[#allocation9 + $0x24] sm:$0xf]
      %v255 = vld [vmem:[#allocation9 + $0x28] sm:$0xf]
      %v256 = vld [vmem:[#allocation9 + $0x2c] sm:$0xf]
      %v257 = vld [vmem:[#allocation9 + $0x30] sm:$0xf]
      %v258 = vld [vmem:[#allocation9 + $0x34] sm:$0xf]
      %v259 = vld [vmem:[#allocation9 + $0x38] sm:$0xf]
      %v260 = vld [vmem:[#allocation9 + $0x3c] sm:$0xf]
      %v261 = vld [vmem:[#allocation9 + $0x40] sm:$0xf]
      %v262 = vld [vmem:[#allocation9 + $0x44] sm:$0xf]
      %v263 = vld [vmem:[#allocation9 + $0x48] sm:$0xf]
      %v264 = vld [vmem:[#allocation9 + $0x4c] sm:$0xf]
      %v265 = vld [vmem:[#allocation9 + $0x50] sm:$0xf]
      %v266 = vld [vmem:[#allocation9 + $0x54] sm:$0xf]
      %v267 = vld [vmem:[#allocation9 + $0x58] sm:$0xf]
      %v268 = vld [vmem:[#allocation9 + $0x5c] sm:$0xf]
      %v269 = vld [vmem:[#allocation9 + $0x60] sm:$0xf]
      %v270 = vld [vmem:[#allocation9 + $0x64] sm:$0xf]
      %v271 = vld [vmem:[#allocation9 + $0x68] sm:$0xf]
      %v272 = vld [vmem:[#allocation9 + $0x6c] sm:$0xf]
      %v273 = vld [vmem:[#allocation9 + $0x70] sm:$0xf]
      %v274 = vld [vmem:[#allocation9 + $0x74] sm:$0xf]
      %v275 = vld [vmem:[#allocation9 + $0x78] sm:$0xf]
      %v276 = vld [vmem:[#allocation9 + $0x7c] sm:$0xf]
      %v277 = vperm.slane %v243, 0
      %v279 = vunpack.c.l.b16 %v244
      %v280 = vunpack.c.h.b16 %v244
      %v281 = vpack.c.b16 %v279, %v279
      %v282 = vpack.c.b16 %v280, %v280
      %v317 = vunpack.c.l.b16 %v245
      %v318 = vunpack.c.l.b16 %v246
      %v319 = vunpack.c.l.b16 %v247
      %v320 = vunpack.c.l.b16 %v248
      %v321 = vunpack.c.l.b16 %v249
      %v322 = vunpack.c.l.b16 %v250
      %v323 = vunpack.c.l.b16 %v251
      %v324 = vunpack.c.l.b16 %v252
      %v325 = vunpack.c.l.b16 %v253
      %v326 = vunpack.c.l.b16 %v254
      %v327 = vunpack.c.l.b16 %v255
      %v328 = vunpack.c.l.b16 %v256
      %v329 = vunpack.c.l.b16 %v257
      %v330 = vunpack.c.l.b16 %v258
      %v331 = vunpack.c.l.b16 %v259
      %v332 = vunpack.c.l.b16 %v260
      %v333 = vunpack.c.l.b16 %v261
      %v334 = vunpack.c.l.b16 %v262
      %v335 = vunpack.c.l.b16 %v263
      %v336 = vunpack.c.l.b16 %v264
      %v337 = vunpack.c.l.b16 %v265
      %v338 = vunpack.c.l.b16 %v266
      %v339 = vunpack.c.l.b16 %v267
      %v340 = vunpack.c.l.b16 %v268
      %v341 = vunpack.c.l.b16 %v269
      %v342 = vunpack.c.l.b16 %v270
      %v343 = vunpack.c.l.b16 %v271
      %v344 = vunpack.c.l.b16 %v272
      %v345 = vunpack.c.l.b16 %v273
      %v346 = vunpack.c.l.b16 %v274
      %v347 = vunpack.c.l.b16 %v275
      %v348 = vunpack.c.l.b16 %v276
      %v349 = vpack.c.b16 %v318, %v317
      %v350 = vpack.c.b16 %v320, %v319
      %v351 = vpack.c.b16 %v322, %v321
      %v352 = vpack.c.b16 %v324, %v323
      %v353 = vpack.c.b16 %v326, %v325
      %v354 = vpack.c.b16 %v328, %v327
      %v355 = vpack.c.b16 %v330, %v329
      %v356 = vpack.c.b16 %v332, %v331
      %v357 = vpack.c.b16 %v334, %v333
      %v358 = vpack.c.b16 %v336, %v335
      %v359 = vpack.c.b16 %v338, %v337
      %v360 = vpack.c.b16 %v340, %v339
      %v361 = vpack.c.b16 %v342, %v341
      %v362 = vpack.c.b16 %v344, %v343
      %v363 = vpack.c.b16 %v346, %v345
      %v364 = vpack.c.b16 %v348, %v347
      %381 = vmatpush.bf16.msra.mxu0 %v356
      %382 = vmatpush.bf16.msra.mxu0 %v355
      %383 = vmatpush.bf16.msra.mxu0 %v354
      %384 = vmatpush.bf16.msra.mxu0 %v353
      %385 = vmatpush.bf16.msra.mxu0 %v352
      %386 = vmatpush.bf16.msra.mxu0 %v351
      %387 = vmatpush.bf16.msra.mxu0 %v350
      %388 = vmatpush.bf16.msra.mxu0 %v349
      %389 = vmatmul.bf16.gmra.mxu0 %v281
      %v390 = vpop.f32.mrf.mxu0
      %v391 = vadd.f32 %v277, %v390
      %v392 = vpop.f32.mrf.mxu0
      %393 = vdwg.mxu0
      %394 = vmatpush.bf16.msra.mxu0 %v364
      %395 = vmatpush.bf16.msra.mxu0 %v363
      %396 = vmatpush.bf16.msra.mxu0 %v362
      %397 = vmatpush.bf16.msra.mxu0 %v361
      %398 = vmatpush.bf16.msra.mxu0 %v360
      %399 = vmatpush.bf16.msra.mxu0 %v359
      %400 = vmatpush.bf16.msra.mxu0 %v358
      %401 = vmatpush.bf16.msra.mxu0 %v357
      %402 = vmatmul.bf16.gmra.mxu0 %v282
      %v403 = vpop.f32.mrf.mxu0
      %v404 = vadd.f32 %v391, %v403
      %v405 = vpop.f32.mrf.mxu0
      %406 = vdwg.mxu0
      %v407 = vrot.slane %v404, 4
      %v408 = vadd.f32 %v404, %v407
      %v409 = vrot.slane %v408, 2
      %v410 = vadd.f32 %v408, %v409
      %v411 = vrot.slane %v410, 1
      %v412 = vadd.f32 %v410, %v411
      %v413 = vmul.f32 %v412, %v213
      %v414 = vsub.f32 %v404, %v413
      %v415 = vmul.f32 %v414, %v414
      %v416 = vrot.slane %v415, 4
      %v417 = vadd.f32 %v415, %v416
      %v418 = vrot.slane %v417, 2
      %v419 = vadd.f32 %v417, %v418
      %v420 = vrot.slane %v419, 1
      %v421 = vadd.f32 %v419, %v420
      %v422 = vmul.f32 %v421, %v213
      %v423 = vadd.f32 %v422, 1e-05
      %v424 = vrsqrt.pop %v423
      %v425 = vmul.f32 %v424, %v423
      %v426 = vmul.f32 %v425, %v424
      %v427 = vmul.f32 0.5, %v426
      %v428 = vsub.f32 1.5, %v427
      %v429 = vmul.f32 %v424, %v428
      %vm430 = vweird.f32 %v423
      %vm431 = vweird.f32 %v424
      %vm432 = vmor %vm430, %vm431
      %v433 = vsel %vm432, %v424, %v429
      %v434 = vmul.f32 %v243, %v433
      %v435 = vperm.slane %v434, 1
      %v436 = vmul.f32 %v414, %v435
      %v437 = vperm.slane %v243, 2
      %v438 = vadd.f32 %v436, %v437
      %v439 = vmax.f32 %v438, 0.0
      %v440 = vpack.c.bf16 %v439, %v439
      %441 = vst [vmem:[#allocation2 + $0x8] sm:$0xf] %v440
    $region57: #{tpu_custom_call.1} parent=1 // pred_fallthru
      _
    %v442 = vld [vmem:[#allocation2] sm:$0xff]
    %v443 = vld [vmem:[#allocation2 + $0x8] sm:$0xf]
    %v444 = vld [vmem:[#allocation12] sm:$0xf]
    %v445 = vld [vmem:[#allocation12 + $0x4] sm:$0xf]
    %v446 = vld [vmem:[#allocation12 + $0x8] sm:$0xf]
    %v447 = vld [vmem:[#allocation12 + $0xc] sm:$0xf]
    %v448 = vld [vmem:[#allocation12 + $0x10] sm:$0xf]
    %v449 = vld [vmem:[#allocation12 + $0x14] sm:$0xf]
    %v450 = vld [vmem:[#allocation12 + $0x18] sm:$0xf]
    %v451 = vld [vmem:[#allocation12 + $0x1c] sm:$0xf]
    %v452 = vld [vmem:[#allocation12 + $0x20] sm:$0xf]
    %v453 = vld [vmem:[#allocation12 + $0x24] sm:$0xf]
    %v454 = vld [vmem:[#allocation12 + $0x28] sm:$0xf]
    %v455 = vld [vmem:[#allocation12 + $0x2c] sm:$0xf]
    %v456 = vld [vmem:[#allocation12 + $0x30] sm:$0xf]
    %v457 = vld [vmem:[#allocation12 + $0x34] sm:$0xf]
    %v458 = vld [vmem:[#allocation12 + $0x38] sm:$0xf]
    %v459 = vld [vmem:[#allocation12 + $0x3c] sm:$0xf]
    %v460 = vld [vmem:[#allocation12 + $0x40] sm:$0xf]
    %v461 = vld [vmem:[#allocation12 + $0x44] sm:$0xf]
    %v462 = vld [vmem:[#allocation12 + $0x48] sm:$0xf]
    %v463 = vld [vmem:[#allocation12 + $0x4c] sm:$0xf]
    %v464 = vld [vmem:[#allocation12 + $0x50] sm:$0xf]
    %v465 = vld [vmem:[#allocation12 + $0x54] sm:$0xf]
    %v466 = vld [vmem:[#allocation12 + $0x58] sm:$0xf]
    %v467 = vld [vmem:[#allocation12 + $0x5c] sm:$0xf]
    %v468 = vld [vmem:[#allocation12 + $0x60] sm:$0xf]
    %v469 = vld [vmem:[#allocation12 + $0x64] sm:$0xf]
    %v470 = vld [vmem:[#allocation12 + $0x68] sm:$0xf]
    %v471 = vld [vmem:[#allocation12 + $0x6c] sm:$0xf]
    %v472 = vld [vmem:[#allocation12 + $0x70] sm:$0xf]
    %v473 = vld [vmem:[#allocation12 + $0x74] sm:$0xf]
    %v474 = vld [vmem:[#allocation12 + $0x78] sm:$0xf]
    %v475 = vld [vmem:[#allocation12 + $0x7c] sm:$0xf]
    %v476 = vld [vmem:[#allocation12 + $0x80] sm:$0xf]
    %v477 = vld [vmem:[#allocation12 + $0x84] sm:$0xf]
    %v478 = vld [vmem:[#allocation12 + $0x88] sm:$0xf]
    %v479 = vld [vmem:[#allocation12 + $0x8c] sm:$0xf]
    %v480 = vld [vmem:[#allocation12 + $0x90] sm:$0xf]
    %v481 = vld [vmem:[#allocation12 + $0x94] sm:$0xf]
    %v482 = vld [vmem:[#allocation12 + $0x98] sm:$0xf]
    %v483 = vld [vmem:[#allocation12 + $0x9c] sm:$0xf]
    %v484 = vld [vmem:[#allocation12 + $0xa0] sm:$0xf]
    %v485 = vld [vmem:[#allocation12 + $0xa4] sm:$0xf]
    %v486 = vld [vmem:[#allocation12 + $0xa8] sm:$0xf]
    %v487 = vld [vmem:[#allocation12 + $0xac] sm:$0xf]
    %v488 = vld [vmem:[#allocation12 + $0xb0] sm:$0xf]
    %v489 = vld [vmem:[#allocation12 + $0xb4] sm:$0xf]
    %v490 = vld [vmem:[#allocation12 + $0xb8] sm:$0xf]
    %v491 = vld [vmem:[#allocation12 + $0xbc] sm:$0xf]
    %v492 = vld [vmem:[%s6] sm:$0x1]
    %v494 = vperm.slane %v492, 0
    %v498 = vunpack.c.l.b16 %v442
    %v499 = vunpack.c.h.b16 %v442
    %v500 = vunpack.c.l.b16 %v443
    %v501 = vpack.c.b16 %v498, %v498
    %v502 = vpack.c.b16 %v499, %v499
    %v503 = vpack.c.b16 %v500, %v500
    %v555 = vunpack.c.l.b16 %v444
    %v556 = vunpack.c.l.b16 %v445
    %v557 = vunpack.c.l.b16 %v446
    %v558 = vunpack.c.l.b16 %v447
    %v559 = vunpack.c.l.b16 %v448
    %v560 = vunpack.c.l.b16 %v449
    %v561 = vunpack.c.l.b16 %v450
    %v562 = vunpack.c.l.b16 %v451
    %v563 = vunpack.c.l.b16 %v452
    %v564 = vunpack.c.l.b16 %v453
    %v565 = vunpack.c.l.b16 %v454
    %v566 = vunpack.c.l.b16 %v455
    %v567 = vunpack.c.l.b16 %v456
    %v568 = vunpack.c.l.b16 %v457
    %v569 = vunpack.c.l.b16 %v458
    %v570 = vunpack.c.l.b16 %v459
    %v571 = vunpack.c.l.b16 %v460
    %v572 = vunpack.c.l.b16 %v461
    %v573 = vunpack.c.l.b16 %v462
    %v574 = vunpack.c.l.b16 %v463
    %v575 = vunpack.c.l.b16 %v464
    %v576 = vunpack.c.l.b16 %v465
    %v577 = vunpack.c.l.b16 %v466
    %v578 = vunpack.c.l.b16 %v467
    %v579 = vunpack.c.l.b16 %v468
    %v580 = vunpack.c.l.b16 %v469
    %v581 = vunpack.c.l.b16 %v470
    %v582 = vunpack.c.l.b16 %v471
    %v583 = vunpack.c.l.b16 %v472
    %v584 = vunpack.c.l.b16 %v473
    %v585 = vunpack.c.l.b16 %v474
    %v586 = vunpack.c.l.b16 %v475
    %v587 = vunpack.c.l.b16 %v476
    %v588 = vunpack.c.l.b16 %v477
    %v589 = vunpack.c.l.b16 %v478
    %v590 = vunpack.c.l.b16 %v479
    %v591 = vunpack.c.l.b16 %v480
    %v592 = vunpack.c.l.b16 %v481
    %v593 = vunpack.c.l.b16 %v482
    %v594 = vunpack.c.l.b16 %v483
    %v595 = vunpack.c.l.b16 %v484
    %v596 = vunpack.c.l.b16 %v485
    %v597 = vunpack.c.l.b16 %v486
    %v598 = vunpack.c.l.b16 %v487
    %v599 = vunpack.c.l.b16 %v488
    %v600 = vunpack.c.l.b16 %v489
    %v601 = vunpack.c.l.b16 %v490
    %v602 = vunpack.c.l.b16 %v491
    %v603 = vpack.c.b16 %v556, %v555
    %v604 = vpack.c.b16 %v558, %v557
    %v605 = vpack.c.b16 %v560, %v559
    %v606 = vpack.c.b16 %v562, %v561
    %v607 = vpack.c.b16 %v564, %v563
    %v608 = vpack.c.b16 %v566, %v565
    %v609 = vpack.c.b16 %v568, %v567
    %v610 = vpack.c.b16 %v570, %v569
    %v611 = vpack.c.b16 %v572, %v571
    %v612 = vpack.c.b16 %v574, %v573
    %v613 = vpack.c.b16 %v576, %v575
    %v614 = vpack.c.b16 %v578, %v577
    %v615 = vpack.c.b16 %v580, %v579
    %v616 = vpack.c.b16 %v582, %v581
    %v617 = vpack.c.b16 %v584, %v583
    %v618 = vpack.c.b16 %v586, %v585
    %v619 = vpack.c.b16 %v588, %v587
    %v620 = vpack.c.b16 %v590, %v589
    %v621 = vpack.c.b16 %v592, %v591
    %v622 = vpack.c.b16 %v594, %v593
    %v623 = vpack.c.b16 %v596, %v595
    %v624 = vpack.c.b16 %v598, %v597
    %v625 = vpack.c.b16 %v600, %v599
    %v626 = vpack.c.b16 %v602, %v601
    %651 = vmatpush.bf16.msra.mxu0 %v610
    %652 = vmatpush.bf16.msra.mxu0 %v609
    %653 = vmatpush.bf16.msra.mxu0 %v608
    %654 = vmatpush.bf16.msra.mxu0 %v607
    %655 = vmatpush.bf16.msra.mxu0 %v606
    %656 = vmatpush.bf16.msra.mxu0 %v605
    %657 = vmatpush.bf16.msra.mxu0 %v604
    %658 = vmatpush.bf16.msra.mxu0 %v603
    %659 = vmatmul.bf16.gmra.mxu0 %v501
    %v660 = vpop.f32.mrf.mxu0
    %v661 = vadd.f32 %v494, %v660
    %v662 = vpop.f32.mrf.mxu0
    %663 = vdwg.mxu0
    %664 = vmatpush.bf16.msra.mxu0 %v618
    %665 = vmatpush.bf16.msra.mxu0 %v617
    %666 = vmatpush.bf16.msra.mxu0 %v616
    %667 = vmatpush.bf16.msra.mxu0 %v615
    %668 = vmatpush.bf16.msra.mxu0 %v614
    %669 = vmatpush.bf16.msra.mxu0 %v613
    %670 = vmatpush.bf16.msra.mxu0 %v612
    %671 = vmatpush.bf16.msra.mxu0 %v611
    %672 = vmatmul.bf16.gmra.mxu0 %v502
    %v673 = vpop.f32.mrf.mxu0
    %v674 = vadd.f32 %v661, %v673
    %v675 = vpop.f32.mrf.mxu0
    %676 = vdwg.mxu0
    %677 = vmatpush.bf16.msra.mxu0 %v626
    %678 = vmatpush.bf16.msra.mxu0 %v625
    %679 = vmatpush.bf16.msra.mxu0 %v624
    %680 = vmatpush.bf16.msra.mxu0 %v623
    %681 = vmatpush.bf16.msra.mxu0 %v622
    %682 = vmatpush.bf16.msra.mxu0 %v621
    %683 = vmatpush.bf16.msra.mxu0 %v620
    %684 = vmatpush.bf16.msra.mxu0 %v619
    %685 = vmatmul.bf16.gmra.mxu0 %v503
    %v686 = vpop.f32.mrf.mxu0
    %v687 = vadd.f32 %v674, %v686
    %v688 = vpop.f32.mrf.mxu0
    %689 = vdwg.mxu0
    %690 = vst [vmem:[#allocation14] sm:$0xff] %v687
    // Predicated region
    $region58: #{tpu_custom_call.1} parent=1 // pred_check
      _
    $region59: #{tpu_custom_call.1} parent=1 // pred_check_branch
      %692 = sbr.rel (0) target = $region61
    $region60: #{tpu_custom_call.1} parent=1 // pred_region
      %694 = vsyncadd [#allocation5], 0
      %s696 = sshll.u32 [#allocation14], 4
      %s697 = int_to_ptr.vmem [resolvable:$true] %s696
      %s698 = sshll.u32 %s7, 4
      %s699 = int_to_ptr.hbm [resolvable:$true] %s698
      %701 = dma.vmem_to_hbm [thread:$0]  %s697, 128, %s699, [#allocation5]
    $region61: #{tpu_custom_call.1} parent=1 // pred_fallthru
      _
    // Predicated region
    $region62: #{tpu_custom_call.1} parent=1 // pred_check
      _
    $region63: #{tpu_custom_call.1} parent=1 // pred_check_branch
      %703 = sbr.rel (0) target = $region65
    $region64: #{tpu_custom_call.1} parent=1 // pred_region
      %705 = dma.done [#allocation5], 128
    $region65: #{tpu_custom_call.1} parent=1 // pred_fallthru
      _
    %706 = vsyncpa [#allocation4], 1
    %707 = vsyncpa [#allocation7], 1
    %708 = vsyncpa [#allocation10], 1
    %709 = vsyncpa [#allocation13], 1
    %710 = vsyncpa [#allocation5], 1

</llo_original>
